<compile_context>
chip_gen: v5e
topology: v5e:2x2
jax: 0.10.0
libtpu: 0.0.40
codegen_flags: <defaults>
</compile_context>

<pallas_src>
import numpy as np
import jax
import jax.numpy as jnp
from jax.experimental import pallas as pl
from jax.experimental.pallas import tpu as pltpu


def _round_up(x: int, m: int) -> int:
    return (x + m - 1) // m * m


def _tpu_params():
    """Return (usable TensorCores for a 'parallel' grid axis,
    VMEM byte budget for live kernel data, vmem_limit_bytes)."""
    kind = ""
    try:
        kind = jax.devices()[0].device_kind.lower()
    except Exception:
        pass
    if "v7" in kind:
        # v7x-class: 2 TensorCores / chip but only 64 MiB VMEM per core.
        return 2, 24 << 20, 48 << 20
    # v5e / v6e (and other 1-TC parts): 128 MiB VMEM -> use much more of it.
    return 1, 72 << 20, 100 << 20


def _four_domain_kernel(x_ref, basis_ref, amp_ref, ph_ref):
    """One grid step: fused dense rfft2 (single MXU matmul covering y_hat & y
    and the real & imaginary basis halves), |.| / angle(.), and in-kernel
    reduction of the |diff|s into tiny per-core lane-dense accumulators."""
    tn = x_ref.shape[0] // 2          # rows [0, tn) = y_hat, [tn, 2tn) = y
    p = amp_ref.shape[-1]             # padded spectrum width (multiple of 128)

    @pl.when(pl.program_id(1) == 0)
    def _init():
        amp_ref[...] = jnp.zeros_like(amp_ref)
        ph_ref[...] = jnp.zeros_like(ph_ref)

    # ONE MXU matmul per step: (2*TN, HW) @ (HW, 2*P) with f32 accumulation.
    spec = jnp.dot(x_ref[...], basis_ref[...],
                   preferred_element_type=jnp.float32)      # (2*TN, 2*P) f32

    re = spec[:, :p]                  # lane-aligned slices (p % 128 == 0)
    im = spec[:, p:]
    amp = jnp.sqrt(re * re + im * im)          # torch.abs of the spectrum
    ph = jnp.arctan2(im, re)                   # torch.angle
    # TODO(synk): if profiling shows the EUP/VPU slot binding after the bf16
    # matmul change, hand-roll arctan2's divide with pl.reciprocal(approx=True).

    amp_diff = jnp.abs(amp[:tn] - amp[tn:])    # sublane-aligned row split
    ph_diff = jnp.abs(ph[:tn] - ph[tn:])

    # Cross-sublane reduction (XLU; free filler next to the MXU) down to one
    # lane-dense row, accumulated in the resident per-core output block.
    amp_ref[0] += jnp.sum(amp_diff, axis=0, keepdims=True)
    ph_ref[0] += jnp.sum(ph_diff, axis=0, keepdims=True)


def _rfft2_basis(H, W, P, dtype):
    """Fused dense rfft2 basis (HW, 2P): columns [0,P) hold cos(ang) and
    columns [P,2P) hold -sin(ang); real columns zero-padded to P each."""
    Wh = W // 2 + 1
    hm = np.outer(np.arange(H), np.arange(H)) / float(H)     # (H, H)  h*m/H
    wk = np.outer(np.arange(W), np.arange(Wh)) / float(W)    # (W, Wh) w*k/W
    ang = 2.0 * np.pi * (hm[:, None, :, None] + wk[None, :, None, :])  # (H,W,H,Wh)
    basis = np.zeros((H * W, 2 * P), np.float32)
    basis[:, :H * Wh] = np.cos(ang).reshape(H * W, H * Wh)
    basis[:, P:P + H * Wh] = (-np.sin(ang)).reshape(H * W, H * Wh)
    return jnp.asarray(basis, dtype=dtype)


def four_domain_loss(y_hat, y, *, use_bf16=True):
    """Pallas equivalent of FourDomainLoss.forward (returns a scalar).

    use_bf16=True runs the DFT matmul on the native bf16 MXU path (f32
    accumulation); set False for a bit-closer-to-torch f32 fallback."""
    if y_hat.shape != y.shape:
        raise ValueError("y_hat and y must have the same shape")
    B, C, H, W = y_hat.shape
    N = B * C
    HW = H * W
    Wh = W // 2 + 1
    P = _round_up(H * Wh, 128)                 # lane-dense padded spectrum width

    n_tc, budget, vmem_limit = _tpu_params()
    cdt = jnp.bfloat16 if use_bf16 else jnp.float32
    ebytes = 2 if use_bf16 else 4

    # ---- live-VMEM estimate (bytes):
    #   fixed: fused basis (HW, 2P), double-buffered by the pipeline.
    #   per image pair (one y_hat + one y row): input block x2 buffers plus
    #   ~16 f32 (1, P)-sized temporaries (spectrum, re/im, amp/phase, diffs).
    fixed = HW * (2 * P) * ebytes * 2
    per_pair = 4 * HW * ebytes + 64 * P
    avail = budget - fixed
    if avail < 8 * per_pair:
        raise ValueError(
            f"FourDomainLoss Pallas kernel: dense rfft2 basis "
            f"({fixed / 2**20:.1f} MiB) does not fit the VMEM budget "
            f"({budget / 2**20:.1f} MiB) for H*W={HW}; a separable two-stage "
            f"DFT variant is required for this image size.")

    tn_cap = avail // per_pair
    tn_cap = max(8, tn_cap // 8 * 8)
    if tn_cap >= 128:                          # prefer MXU-friendly multiples
        tn_cap = tn_cap // 128 * 128
    TN = int(min(tn_cap, 512, _round_up(N, 8)))  # images per grid step

    NB = -(-N // TN)                           # image blocks
    n_cores = max(1, min(n_tc, NB))            # 2 only on v7x-class parts
    n_inner = -(-NB // n_cores)
    NB_total = n_cores * n_inner
    N_pad = NB_total * TN                      # zero-padded images add 0 loss

    def prep(x):
        x = x.reshape(N, HW).astype(jnp.float32)
        x = jnp.pad(x, ((0, N_pad - N), (0, 0)))
        return x.reshape(NB_total, TN, HW).astype(cdt)

    # Stack y_hat / y along M so each grid step is a single (2*TN, HW) block.
    x_all = jnp.concatenate([prep(y_hat), prep(y)], axis=1)
    x_all = x_all.reshape(NB_total * 2 * TN, HW)

    basis = _rfft2_basis(H, W, P, cdt)         # (HW, 2P), cos | -sin fused

    amp_part, ph_part = pl.pallas_call(
        _four_domain_kernel,
        out_shape=(jax.ShapeDtypeStruct((n_cores, 1, P), jnp.float32),
                   jax.ShapeDtypeStruct((n_cores, 1, P), jnp.float32)),
        grid=(n_cores, n_inner),
        in_specs=[
            # stacked y_hat|y image block
            pl.BlockSpec((2 * TN, HW), lambda c, n: (c * n_inner + n, 0)),
            # fused cos|-sin basis; constant index_map -> fetched once.
            # TODO(synk): pipeline_mode=pl.Buffered(1) would reclaim its double
            # buffer on v7x for large HW; kept default for portability.
            pl.BlockSpec((HW, 2 * P), lambda c, n: (0, 0)),
        ],
        out_specs=(pl.BlockSpec((1, 1, P), lambda c, n: (c, 0, 0)),   # amp acc
                   pl.BlockSpec((1, 1, P), lambda c, n: (c, 0, 0))),  # phase acc
        compiler_params=pltpu.CompilerParams(
            dimension_semantics=("parallel", "arbitrary"),  # per-core acc => no race
            vmem_limit_bytes=vmem_limit),
    )(x_all, basis)

    # F.l1_loss 'mean' divides by the true (unpadded) rfft2 numel.
    count = float(N * H * Wh)
    return jnp.sum(amp_part) / count + jnp.sum(ph_part) / count


if __name__ == "__main__":
    key = jax.random.PRNGKey(0)
    k1, k2 = jax.random.split(key)
    B, C, H, W = 2, 4, 16, 16
    y_hat = jax.random.normal(k1, (B, C, H, W), dtype=jnp.float32)
    y = jax.random.normal(k2, (B, C, H, W), dtype=jnp.float32)

    loss = jax.jit(four_domain_loss)(y_hat, y)
    jax.block_until_ready(loss)
    print("KERNEL_OK")
</pallas_src>

<mosaic_0001>
module attributes {stable_mosaic.version = 11 : i64} {
  func.func @_four_domain_kernel(%arg0: i32, %arg1: i32, %arg2: memref<16x256xbf16, #tpu.memory_space<vmem>>, %arg3: memref<256x512xbf16, #tpu.memory_space<vmem>>, %arg4: memref<1x1x256xf32, #tpu.memory_space<vmem>>, %arg5: memref<1x1x256xf32, #tpu.memory_space<vmem>>) attributes {dimension_semantics = [#tpu.dimension_semantics<parallel>, #tpu.dimension_semantics<arbitrary>], iteration_bounds = array<i64: 1, 1>, scalar_prefetch = 0 : i64, scratch_operands = 0 : i64, tpu.core_type = #tpu.core_type<tc>, window_params = [{transform_indices = @transform_0, window_bounds = array<i64: 16, 256>}, {pipeline_mode = #tpu.pipeline_mode<synchronous>, transform_indices = @transform_1, window_bounds = array<i64: 256, 512>}, {transform_indices = @transform_2, window_bounds = array<i64: 1, 1, 256>}, {transform_indices = @transform_3, window_bounds = array<i64: 1, 1, 256>}]} {
    %c0_i32 = arith.constant 0 : i32
    %0 = arith.cmpi eq, %arg1, %c0_i32 : i32
    %1 = arith.extui %0 : i1 to i32
    %c0_i32_0 = arith.constant 0 : i32
    %2 = arith.cmpi ne, %1, %c0_i32_0 : i32
    scf.if %2 {
      %cst_18 = arith.constant 0.000000e+00 : f32
      %37 = vector.broadcast %cst_18 : f32 to vector<1x1x256xf32>
      %c0_19 = arith.constant 0 : index
      %c0_20 = arith.constant 0 : index
      %c0_21 = arith.constant 0 : index
      %38 = vector.load %arg4[%c0_19, %c0_20, %c0_21] : memref<1x1x256xf32, #tpu.memory_space<vmem>>, vector<1x1x256xf32>
      tpu.vector_store %arg4[%c0_19, %c0_20, %c0_21], %37 {strides = array<i32>} : memref<1x1x256xf32, #tpu.memory_space<vmem>>, vector<1x1x256xf32>,
      %cst_22 = arith.constant 0.000000e+00 : f32
      %39 = vector.broadcast %cst_22 : f32 to vector<1x1x256xf32>
      %c0_23 = arith.constant 0 : index
      %c0_24 = arith.constant 0 : index
      %c0_25 = arith.constant 0 : index
      %40 = vector.load %arg5[%c0_23, %c0_24, %c0_25] : memref<1x1x256xf32, #tpu.memory_space<vmem>>, vector<1x1x256xf32>
      tpu.vector_store %arg5[%c0_23, %c0_24, %c0_25], %39 {strides = array<i32>} : memref<1x1x256xf32, #tpu.memory_space<vmem>>, vector<1x1x256xf32>,
    } else {
    }
    %c0 = arith.constant 0 : index
    %c0_1 = arith.constant 0 : index
    %3 = vector.load %arg2[%c0, %c0_1] : memref<16x256xbf16, #tpu.memory_space<vmem>>, vector<16x256xbf16>
    %c0_2 = arith.constant 0 : index
    %c0_3 = arith.constant 0 : index
    %4 = vector.load %arg3[%c0_2, %c0_3] : memref<256x512xbf16, #tpu.memory_space<vmem>>, vector<256x512xbf16>
    %cst = arith.constant dense<0.000000e+00> : vector<16x512xf32>
    %5 = tpu.matmul %3, %4, %cst {dimension_numbers = #tpu.dot_dimension_numbers<[1], [0], [0], [1], [0, 0, 1, 1], [], []>} : vector<16x256xbf16>, vector<256x512xbf16>, vector<16x512xf32> -> vector<16x512xf32>
    %6 = vector.extract_strided_slice %5 {offsets = [0, 0], sizes = [16, 256], strides = [1, 1]} : vector<16x512xf32> to vector<16x256xf32>
    %7 = vector.extract_strided_slice %5 {offsets = [0, 256], sizes = [16, 256], strides = [1, 1]} : vector<16x512xf32> to vector<16x256xf32>
    %8 = arith.mulf %6, %6 : vector<16x256xf32>
    %9 = arith.mulf %7, %7 : vector<16x256xf32>
    %10 = arith.addf %8, %9 : vector<16x256xf32>
    %11 = math.sqrt %10 : vector<16x256xf32>
    %12 = math.atan2 %7, %6 : vector<16x256xf32>
    %13 = vector.extract_strided_slice %11 {offsets = [0, 0], sizes = [8, 256], strides = [1, 1]} : vector<16x256xf32> to vector<8x256xf32>
    %14 = vector.extract_strided_slice %11 {offsets = [8, 0], sizes = [8, 256], strides = [1, 1]} : vector<16x256xf32> to vector<8x256xf32>
    %15 = arith.subf %13, %14 : vector<8x256xf32>
    %16 = math.absf %15 : vector<8x256xf32>
    %17 = vector.extract_strided_slice %12 {offsets = [0, 0], sizes = [8, 256], strides = [1, 1]} : vector<16x256xf32> to vector<8x256xf32>
    %18 = vector.extract_strided_slice %12 {offsets = [8, 0], sizes = [8, 256], strides = [1, 1]} : vector<16x256xf32> to vector<8x256xf32>
    %19 = arith.subf %17, %18 : vector<8x256xf32>
    %20 = math.absf %19 : vector<8x256xf32>
    %c0_4 = arith.constant 0 : index
    %c0_5 = arith.constant 0 : index
    %c0_6 = arith.constant 0 : index
    %21 = vector.load %arg4[%c0_4, %c0_5, %c0_6] : memref<1x1x256xf32, #tpu.memory_space<vmem>>, vector<1x1x256xf32>
    %22 = vector.shape_cast %21 : vector<1x1x256xf32> to vector<1x256xf32>
    %cst_7 = arith.constant dense<0.000000e+00> : vector<256xf32>
    %23 = vector.multi_reduction <add>, %16, %cst_7 [0] : vector<8x256xf32> to vector<256xf32>
    %24 = vector.shape_cast %23 : vector<256xf32> to vector<1x256xf32>
    %25 = arith.addf %22, %24 : vector<1x256xf32>
    %c0_8 = arith.constant 0 : index
    %c0_9 = arith.constant 0 : index
    %c0_10 = arith.constant 0 : index
    %26 = vector.load %arg4[%c0_8, %c0_9, %c0_10] : memref<1x1x256xf32, #tpu.memory_space<vmem>>, vector<1x1x256xf32>
    %27 = vector.shape_cast %26 : vector<1x1x256xf32> to vector<1x256xf32>
    %28 = vector.shape_cast %25 : vector<1x256xf32> to vector<1x1x256xf32>
    tpu.vector_store %arg4[%c0_8, %c0_9, %c0_10], %28 {strides = array<i32>} : memref<1x1x256xf32, #tpu.memory_space<vmem>>, vector<1x1x256xf32>,
    %c0_11 = arith.constant 0 : index
    %c0_12 = arith.constant 0 : index
    %c0_13 = arith.constant 0 : index
    %29 = vector.load %arg5[%c0_11, %c0_12, %c0_13] : memref<1x1x256xf32, #tpu.memory_space<vmem>>, vector<1x1x256xf32>
    %30 = vector.shape_cast %29 : vector<1x1x256xf32> to vector<1x256xf32>
    %cst_14 = arith.constant dense<0.000000e+00> : vector<256xf32>
    %31 = vector.multi_reduction <add>, %20, %cst_14 [0] : vector<8x256xf32> to vector<256xf32>
    %32 = vector.shape_cast %31 : vector<256xf32> to vector<1x256xf32>
    %33 = arith.addf %30, %32 : vector<1x256xf32>
    %c0_15 = arith.constant 0 : index
    %c0_16 = arith.constant 0 : index
    %c0_17 = arith.constant 0 : index
    %34 = vector.load %arg5[%c0_15, %c0_16, %c0_17] : memref<1x1x256xf32, #tpu.memory_space<vmem>>, vector<1x1x256xf32>
    %35 = vector.shape_cast %34 : vector<1x1x256xf32> to vector<1x256xf32>
    %36 = vector.shape_cast %33 : vector<1x256xf32> to vector<1x1x256xf32>
    tpu.vector_store %arg5[%c0_15, %c0_16, %c0_17], %36 {strides = array<i32>} : memref<1x1x256xf32, #tpu.memory_space<vmem>>, vector<1x1x256xf32>,
    return
  }
  func.func @transform_0(%arg0: i32, %arg1: i32) -> (i32, i32) {
    %c1_i32 = arith.constant 1 : i32
    %0 = arith.muli %arg0, %c1_i32 : i32
    %1 = arith.addi %0, %arg1 : i32
    %c0_i32 = arith.constant 0 : i32
    %c0_i32_0 = arith.constant 0 : i32
    return %1, %c0_i32 : i32, i32
  }
  func.func @transform_1(%arg0: i32, %arg1: i32) -> (i32, i32) {
    %c0_i32 = arith.constant 0 : i32
    %c0_i32_0 = arith.constant 0 : i32
    %c0_i32_1 = arith.constant 0 : i32
    return %c0_i32, %c0_i32_0 : i32, i32
  }
  func.func @transform_2(%arg0: i32, %arg1: i32) -> (i32, i32, i32) {
    %c0_i32 = arith.constant 0 : i32
    %c0_i32_0 = arith.constant 0 : i32
    %c0_i32_1 = arith.constant 0 : i32
    return %arg0, %c0_i32, %c0_i32_0 : i32, i32, i32
  }
  func.func @transform_3(%arg0: i32, %arg1: i32) -> (i32, i32, i32) {
    %c0_i32 = arith.constant 0 : i32
    %c0_i32_0 = arith.constant 0 : i32
    %c0_i32_1 = arith.constant 0 : i32
    return %arg0, %c0_i32, %c0_i32_0 : i32, i32, i32
  }
}

</mosaic_0001>

<llo_original>
// kernel: four_domain_loss.1
$region0: #{four_domain_loss.1}
  #allocation0 [shape = 'u32[]', space=smem, size = 0x4, offset = 0x4, fixed_abs, tag = 'smem constant byte address 0x4 - core index']
  #allocation1 [shape = 'u32[72,128]{1,0:T(1,128)}', space=vmem, size = 0x9000, scoped, tag = 'internal scratch']
  %s0 = inlined_call_operand.vmem [shape: bf16[16,256], index: 0, kind: input, shape index: {}]
  %s1 = inlined_call_operand.hbm [shape: bf16[256,512], index: 1, kind: input, shape index: {}]
  %s2 = inlined_call_operand.vmem [shape: f32[1,1,256], index: 2, kind: output, shape index: {0}]
  %s3 = inlined_call_operand.vmem [shape: f32[1,1,256], index: 3, kind: output, shape index: {1}]
  %4 = xla_tuple %s2, %s3
  %s5 = sld [smem:[#allocation0]]
  $region34: #{four_domain_loss.1} parent=0
    _
  %s7 = ssub.s32 1, %s5
  %s8 = scalar_select 0, %s7, %s5
  $region1: #{four_domain_loss.1} parent=0
    #allocation2 [shape = 'u8[262144]{0}', space=vmem, size = 0x40000, scoped, tag = 'input window, operand 1, single buffered']
    #allocation3 [shape = 's32[1]{0}', space=sflag, size = 0x4, scoped, tag = 'scoped memory for four_domain_loss.1']
    %9 = vsyncpa [#allocation3], 0
    // Predicated region
    $region2: #{four_domain_loss.1} parent=1 // pred_check
      _
    $region3: #{four_domain_loss.1} parent=1 // pred_check_branch
      %11 = sbr.rel (0) target = $region5
    $region4: #{four_domain_loss.1} parent=1 // pred_region
      %s12 = sadd.s32 0, 0
      %s13 = smul.u32 2, %s12
      %p14 = scmp.lt.s32.totalorder %s13, 1
      %s15 = scalar_select %p14, %s13, 1
      %s16 = smul.addr %s15, 2
      %s17 = smul.addr %s16, 4
      %s18 = scalar_lea.vmem %s0, %s17
      %s19 = sadd.s32 0, 0
      %s20 = smul.u32 2, %s19
    $region5: #{four_domain_loss.1} parent=1 // pred_fallthru
      _
    // Predicated region
    $region6: #{four_domain_loss.1} parent=1 // pred_check
      _
    $region7: #{four_domain_loss.1} parent=1 // pred_check_branch
      %22 = sbr.rel (0) target = $region9
    $region8: #{four_domain_loss.1} parent=1 // pred_region
      %24 = vsyncadd [#allocation3], 0
      %s25 = sshll.u32 %s1, 4
      %s26 = int_to_ptr.hbm [resolvable:$true] %s25
      %s27 = sshll.u32 [#allocation2], 4
      %s28 = int_to_ptr.vmem [resolvable:$true] %s27
      %33 = dma.hbm_to_vmem [thread:$0]  %s26, 8192, %s28, [#allocation3], 256, 256, 16
    $region9: #{four_domain_loss.1} parent=1 // pred_fallthru
      _
    // Predicated region
    $region10: #{four_domain_loss.1} parent=1 // pred_check
      _
    $region11: #{four_domain_loss.1} parent=1 // pred_check_branch
      %35 = sbr.rel (0) target = $region13
    $region12: #{four_domain_loss.1} parent=1 // pred_region
      %37 = dma.done [#allocation3], 8192
    $region13: #{four_domain_loss.1} parent=1 // pred_fallthru
      _
    %s38 = sadd.s32 0, 0
    %s39 = smul.u32 2, %s38
    %p40 = scmp.lt.s32.totalorder %s39, 1
    %s41 = scalar_select %p40, %s39, 1
    %s42 = smul.addr %s41, 2
    %s43 = smul.addr %s42, 4
    %s44 = scalar_lea.vmem %s0, %s43
    %s45 = sadd.s32 0, 0
    %s46 = smul.u32 2, %s45
    %p47 = scmp.lt.s32.totalorder %s46, 1
    %s48 = scalar_select %p47, %s46, 1
    %s49 = smul.addr %s48, 2
    %s50 = smul.addr %s49, 4
    %s51 = scalar_lea.vmem %s0, %s50
    %s52 = sadd.s32 0, 0
    %s53 = smul.u32 2, %s52
    %p54 = scmp.eq.s32.totalorder 0, 0
    // Predicated region
    $region14: #{four_domain_loss.1} parent=1 // pred_check
      %p55 = pneg %p54
    $region15: #{four_domain_loss.1} parent=1 // pred_check_branch
      %57 = sbr.rel (%p55) target = $region17
    $region16: #{four_domain_loss.1} parent=1 // pred_region
      %v58 = vlaneseq
      %vm59 = vcmp.ge.s32.totalorder %v58, 0
      %vm60 = vcmp.lt.s32.totalorder %v58, 256
      %vm61 = vmand %vm59, %vm60
      %62 = vst.msk [vmem:[%s2] sm:$0x3] %vm61, 0.0
      %63 = vst.msk [vmem:[%s3] sm:$0x3] %vm61, 0.0
    $region17: #{four_domain_loss.1} parent=1 // pred_fallthru
      _
    %v64 = vld [vmem:[%s51] sm:$0xff]
    %v65 = vld [vmem:[%s51 + $0x8] sm:$0xff]
    %v66 = vld [vmem:[#allocation2] sm:$0xff]
    %v67 = vld [vmem:[#allocation2 + $0x8] sm:$0xff]
    %v68 = vld [vmem:[#allocation2 + $0x10] sm:$0xff]
    %v69 = vld [vmem:[#allocation2 + $0x18] sm:$0xff]
    %v70 = vld [vmem:[#allocation2 + $0x20] sm:$0xff]
    %v71 = vld [vmem:[#allocation2 + $0x28] sm:$0xff]
    %v72 = vld [vmem:[#allocation2 + $0x30] sm:$0xff]
    %v73 = vld [vmem:[#allocation2 + $0x38] sm:$0xff]
    %v74 = vld [vmem:[#allocation2 + $0x40] sm:$0xff]
    %v75 = vld [vmem:[#allocation2 + $0x48] sm:$0xff]
    %v76 = vld [vmem:[#allocation2 + $0x50] sm:$0xff]
    %v77 = vld [vmem:[#allocation2 + $0x58] sm:$0xff]
    %v78 = vld [vmem:[#allocation2 + $0x60] sm:$0xff]
    %v79 = vld [vmem:[#allocation2 + $0x68] sm:$0xff]
    %v80 = vld [vmem:[#allocation2 + $0x70] sm:$0xff]
    %v81 = vld [vmem:[#allocation2 + $0x78] sm:$0xff]
    %v82 = vld [vmem:[#allocation2 + $0x80] sm:$0xff]
    %v83 = vld [vmem:[#allocation2 + $0x88] sm:$0xff]
    %v84 = vld [vmem:[#allocation2 + $0x90] sm:$0xff]
    %v85 = vld [vmem:[#allocation2 + $0x98] sm:$0xff]
    %v86 = vld [vmem:[#allocation2 + $0xa0] sm:$0xff]
    %v87 = vld [vmem:[#allocation2 + $0xa8] sm:$0xff]
    %v88 = vld [vmem:[#allocation2 + $0xb0] sm:$0xff]
    %v89 = vld [vmem:[#allocation2 + $0xb8] sm:$0xff]
    %v90 = vld [vmem:[#allocation2 + $0xc0] sm:$0xff]
    %v91 = vld [vmem:[#allocation2 + $0xc8] sm:$0xff]
    %v92 = vld [vmem:[#allocation2 + $0xd0] sm:$0xff]
    %v93 = vld [vmem:[#allocation2 + $0xd8] sm:$0xff]
    %v94 = vld [vmem:[#allocation2 + $0xe0] sm:$0xff]
    %v95 = vld [vmem:[#allocation2 + $0xe8] sm:$0xff]
    %v96 = vld [vmem:[#allocation2 + $0xf0] sm:$0xff]
    %v97 = vld [vmem:[#allocation2 + $0xf8] sm:$0xff]
    %v98 = vld [vmem:[#allocation2 + $0x100] sm:$0xff]
    %v99 = vld [vmem:[#allocation2 + $0x108] sm:$0xff]
    %v100 = vld [vmem:[#allocation2 + $0x110] sm:$0xff]
    %v101 = vld [vmem:[#allocation2 + $0x118] sm:$0xff]
    %v102 = vld [vmem:[#allocation2 + $0x120] sm:$0xff]
    %v103 = vld [vmem:[#allocation2 + $0x128] sm:$0xff]
    %v104 = vld [vmem:[#allocation2 + $0x130] sm:$0xff]
    %v105 = vld [vmem:[#allocation2 + $0x138] sm:$0xff]
    %v106 = vld [vmem:[#allocation2 + $0x140] sm:$0xff]
    %v107 = vld [vmem:[#allocation2 + $0x148] sm:$0xff]
    %v108 = vld [vmem:[#allocation2 + $0x150] sm:$0xff]
    %v109 = vld [vmem:[#allocation2 + $0x158] sm:$0xff]
    %v110 = vld [vmem:[#allocation2 + $0x160] sm:$0xff]
    %v111 = vld [vmem:[#allocation2 + $0x168] sm:$0xff]
    %v112 = vld [vmem:[#allocation2 + $0x170] sm:$0xff]
    %v113 = vld [vmem:[#allocation2 + $0x178] sm:$0xff]
    %v114 = vld [vmem:[#allocation2 + $0x180] sm:$0xff]
    %v115 = vld [vmem:[#allocation2 + $0x188] sm:$0xff]
    %v116 = vld [vmem:[#allocation2 + $0x190] sm:$0xff]
    %v117 = vld [vmem:[#allocation2 + $0x198] sm:$0xff]
    %v118 = vld [vmem:[#allocation2 + $0x1a0] sm:$0xff]
    %v119 = vld [vmem:[#allocation2 + $0x1a8] sm:$0xff]
    %v120 = vld [vmem:[#allocation2 + $0x1b0] sm:$0xff]
    %v121 = vld [vmem:[#allocation2 + $0x1b8] sm:$0xff]
    %v122 = vld [vmem:[#allocation2 + $0x1c0] sm:$0xff]
    %v123 = vld [vmem:[#allocation2 + $0x1c8] sm:$0xff]
    %v124 = vld [vmem:[#allocation2 + $0x1d0] sm:$0xff]
    %v125 = vld [vmem:[#allocation2 + $0x1d8] sm:$0xff]
    %v126 = vld [vmem:[#allocation2 + $0x1e0] sm:$0xff]
    %v127 = vld [vmem:[#allocation2 + $0x1e8] sm:$0xff]
    %v128 = vld [vmem:[#allocation2 + $0x1f0] sm:$0xff]
    %v129 = vld [vmem:[#allocation2 + $0x1f8] sm:$0xff]
    %v132 = vunpack.c.l.b16 %v64
    %v133 = vunpack.c.h.b16 %v64
    %v134 = vunpack.c.l.b16 %v65
    %v135 = vunpack.c.h.b16 %v65
    %v136 = vpack.c.b16 %v134, %v132
    %v137 = vpack.c.b16 %v135, %v133
    %v204 = vunpack.c.l.b16 %v66
    %v205 = vunpack.c.h.b16 %v66
    %v206 = vunpack.c.l.b16 %v67
    %v207 = vunpack.c.h.b16 %v67
    %v208 = vunpack.c.l.b16 %v68
    %v209 = vunpack.c.h.b16 %v68
    %v210 = vunpack.c.l.b16 %v69
    %v211 = vunpack.c.h.b16 %v69
    %v212 = vunpack.c.l.b16 %v70
    %v213 = vunpack.c.h.b16 %v70
    %v214 = vunpack.c.l.b16 %v71
    %v215 = vunpack.c.h.b16 %v71
    %v216 = vunpack.c.l.b16 %v72
    %v217 = vunpack.c.h.b16 %v72
    %v218 = vunpack.c.l.b16 %v73
    %v219 = vunpack.c.h.b16 %v73
    %v220 = vunpack.c.l.b16 %v74
    %v221 = vunpack.c.h.b16 %v74
    %v222 = vunpack.c.l.b16 %v75
    %v223 = vunpack.c.h.b16 %v75
    %v224 = vunpack.c.l.b16 %v76
    %v225 = vunpack.c.h.b16 %v76
    %v226 = vunpack.c.l.b16 %v77
    %v227 = vunpack.c.h.b16 %v77
    %v228 = vunpack.c.l.b16 %v78
    %v229 = vunpack.c.h.b16 %v78
    %v230 = vunpack.c.l.b16 %v79
    %v231 = vunpack.c.h.b16 %v79
    %v232 = vunpack.c.l.b16 %v80
    %v233 = vunpack.c.h.b16 %v80
    %v234 = vunpack.c.l.b16 %v81
    %v235 = vunpack.c.h.b16 %v81
    %v236 = vunpack.c.l.b16 %v82
    %v237 = vunpack.c.h.b16 %v82
    %v238 = vunpack.c.l.b16 %v83
    %v239 = vunpack.c.h.b16 %v83
    %v240 = vunpack.c.l.b16 %v84
    %v241 = vunpack.c.h.b16 %v84
    %v242 = vunpack.c.l.b16 %v85
    %v243 = vunpack.c.h.b16 %v85
    %v244 = vunpack.c.l.b16 %v86
    %v245 = vunpack.c.h.b16 %v86
    %v246 = vunpack.c.l.b16 %v87
    %v247 = vunpack.c.h.b16 %v87
    %v248 = vunpack.c.l.b16 %v88
    %v249 = vunpack.c.h.b16 %v88
    %v250 = vunpack.c.l.b16 %v89
    %v251 = vunpack.c.h.b16 %v89
    %v252 = vunpack.c.l.b16 %v90
    %v253 = vunpack.c.h.b16 %v90
    %v254 = vunpack.c.l.b16 %v91
    %v255 = vunpack.c.h.b16 %v91
    %v256 = vunpack.c.l.b16 %v92
    %v257 = vunpack.c.h.b16 %v92
    %v258 = vunpack.c.l.b16 %v93
    %v259 = vunpack.c.h.b16 %v93
    %v260 = vunpack.c.l.b16 %v94
    %v261 = vunpack.c.h.b16 %v94
    %v262 = vunpack.c.l.b16 %v95
    %v263 = vunpack.c.h.b16 %v95
    %v264 = vunpack.c.l.b16 %v96
    %v265 = vunpack.c.h.b16 %v96
    %v266 = vunpack.c.l.b16 %v97
    %v267 = vunpack.c.h.b16 %v97
    %v268 = vunpack.c.l.b16 %v98
    %v269 = vunpack.c.h.b16 %v98
    %v270 = vunpack.c.l.b16 %v99
    %v271 = vunpack.c.h.b16 %v99
    %v272 = vunpack.c.l.b16 %v100
    %v273 = vunpack.c.h.b16 %v100
    %v274 = vunpack.c.l.b16 %v101
    %v275 = vunpack.c.h.b16 %v101
    %v276 = vunpack.c.l.b16 %v102
    %v277 = vunpack.c.h.b16 %v102
    %v278 = vunpack.c.l.b16 %v103
    %v279 = vunpack.c.h.b16 %v103
    %v280 = vunpack.c.l.b16 %v104
    %v281 = vunpack.c.h.b16 %v104
    %v282 = vunpack.c.l.b16 %v105
    %v283 = vunpack.c.h.b16 %v105
    %v284 = vunpack.c.l.b16 %v106
    %v285 = vunpack.c.h.b16 %v106
    %v286 = vunpack.c.l.b16 %v107
    %v287 = vunpack.c.h.b16 %v107
    %v288 = vunpack.c.l.b16 %v108
    %v289 = vunpack.c.h.b16 %v108
    %v290 = vunpack.c.l.b16 %v109
    %v291 = vunpack.c.h.b16 %v109
    %v292 = vunpack.c.l.b16 %v110
    %v293 = vunpack.c.h.b16 %v110
    %v294 = vunpack.c.l.b16 %v111
    %v295 = vunpack.c.h.b16 %v111
    %v296 = vunpack.c.l.b16 %v112
    %v297 = vunpack.c.h.b16 %v112
    %v298 = vunpack.c.l.b16 %v113
    %v299 = vunpack.c.h.b16 %v113
    %v300 = vunpack.c.l.b16 %v114
    %v301 = vunpack.c.h.b16 %v114
    %v302 = vunpack.c.l.b16 %v115
    %v303 = vunpack.c.h.b16 %v115
    %v304 = vunpack.c.l.b16 %v116
    %v305 = vunpack.c.h.b16 %v116
    %v306 = vunpack.c.l.b16 %v117
    %v307 = vunpack.c.h.b16 %v117
    %v308 = vunpack.c.l.b16 %v118
    %v309 = vunpack.c.h.b16 %v118
    %v310 = vunpack.c.l.b16 %v119
    %v311 = vunpack.c.h.b16 %v119
    %v312 = vunpack.c.l.b16 %v120
    %v313 = vunpack.c.h.b16 %v120
    %v314 = vunpack.c.l.b16 %v121
    %v315 = vunpack.c.h.b16 %v121
    %v316 = vunpack.c.l.b16 %v122
    %v317 = vunpack.c.h.b16 %v122
    %v318 = vunpack.c.l.b16 %v123
    %v319 = vunpack.c.h.b16 %v123
    %v320 = vunpack.c.l.b16 %v124
    %v321 = vunpack.c.h.b16 %v124
    %v322 = vunpack.c.l.b16 %v125
    %v323 = vunpack.c.h.b16 %v125
    %v324 = vunpack.c.l.b16 %v126
    %v325 = vunpack.c.h.b16 %v126
    %v326 = vunpack.c.l.b16 %v127
    %v327 = vunpack.c.h.b16 %v127
    %v328 = vunpack.c.l.b16 %v128
    %v329 = vunpack.c.h.b16 %v128
    %v330 = vunpack.c.l.b16 %v129
    %v331 = vunpack.c.h.b16 %v129
    %v332 = vpack.c.b16 %v208, %v204
    %v333 = vpack.c.b16 %v209, %v205
    %v334 = vpack.c.b16 %v210, %v206
    %v335 = vpack.c.b16 %v211, %v207
    %v336 = vpack.c.b16 %v216, %v212
    %v337 = vpack.c.b16 %v217, %v213
    %v338 = vpack.c.b16 %v218, %v214
    %v339 = vpack.c.b16 %v219, %v215
    %v340 = vpack.c.b16 %v224, %v220
    %v341 = vpack.c.b16 %v225, %v221
    %v342 = vpack.c.b16 %v226, %v222
    %v343 = vpack.c.b16 %v227, %v223
    %v344 = vpack.c.b16 %v232, %v228
    %v345 = vpack.c.b16 %v233, %v229
    %v346 = vpack.c.b16 %v234, %v230
    %v347 = vpack.c.b16 %v235, %v231
    %v348 = vpack.c.b16 %v240, %v236
    %v349 = vpack.c.b16 %v241, %v237
    %v350 = vpack.c.b16 %v242, %v238
    %v351 = vpack.c.b16 %v243, %v239
    %v352 = vpack.c.b16 %v248, %v244
    %v353 = vpack.c.b16 %v249, %v245
    %v354 = vpack.c.b16 %v250, %v246
    %v355 = vpack.c.b16 %v251, %v247
    %v356 = vpack.c.b16 %v256, %v252
    %v357 = vpack.c.b16 %v257, %v253
    %v358 = vpack.c.b16 %v258, %v254
    %v359 = vpack.c.b16 %v259, %v255
    %v360 = vpack.c.b16 %v264, %v260
    %v361 = vpack.c.b16 %v265, %v261
    %v362 = vpack.c.b16 %v266, %v262
    %v363 = vpack.c.b16 %v267, %v263
    %v364 = vpack.c.b16 %v272, %v268
    %v365 = vpack.c.b16 %v273, %v269
    %v366 = vpack.c.b16 %v274, %v270
    %v367 = vpack.c.b16 %v275, %v271
    %v368 = vpack.c.b16 %v280, %v276
    %v369 = vpack.c.b16 %v281, %v277
    %v370 = vpack.c.b16 %v282, %v278
    %v371 = vpack.c.b16 %v283, %v279
    %v372 = vpack.c.b16 %v288, %v284
    %v373 = vpack.c.b16 %v289, %v285
    %v374 = vpack.c.b16 %v290, %v286
    %v375 = vpack.c.b16 %v291, %v287
    %v376 = vpack.c.b16 %v296, %v292
    %v377 = vpack.c.b16 %v297, %v293
    %v378 = vpack.c.b16 %v298, %v294
    %v379 = vpack.c.b16 %v299, %v295
    %v380 = vpack.c.b16 %v304, %v300
    %v381 = vpack.c.b16 %v305, %v301
    %v382 = vpack.c.b16 %v306, %v302
    %v383 = vpack.c.b16 %v307, %v303
    %v384 = vpack.c.b16 %v312, %v308
    %v385 = vpack.c.b16 %v313, %v309
    %v386 = vpack.c.b16 %v314, %v310
    %v387 = vpack.c.b16 %v315, %v311
    %v388 = vpack.c.b16 %v320, %v316
    %v389 = vpack.c.b16 %v321, %v317
    %v390 = vpack.c.b16 %v322, %v318
    %v391 = vpack.c.b16 %v323, %v319
    %v392 = vpack.c.b16 %v328, %v324
    %v393 = vpack.c.b16 %v329, %v325
    %v394 = vpack.c.b16 %v330, %v326
    %v395 = vpack.c.b16 %v331, %v327
    %460 = vmatpush.bf16.msra.mxu0 %v360
    %461 = vmatpush.bf16.msra.mxu0 %v356
    %462 = vmatpush.bf16.msra.mxu0 %v352
    %463 = vmatpush.bf16.msra.mxu0 %v348
    %464 = vmatpush.bf16.msra.mxu0 %v344
    %465 = vmatpush.bf16.msra.mxu0 %v340
    %466 = vmatpush.bf16.msra.mxu0 %v336
    %467 = vmatpush.bf16.msra.mxu0 %v332
    %468 = vmatmul.bf16.gmra.mxu0 %v136
    %v469 = vpop.f32.mrf.mxu0
    %v470 = vadd.f32 0.0, %v469
    %v471 = vpop.f32.mrf.mxu0
    %v472 = vadd.f32 0.0, %v471
    %473 = vdwg.mxu0
    %474 = vmatpush.bf16.msra.mxu0 %v392
    %475 = vmatpush.bf16.msra.mxu0 %v388
    %476 = vmatpush.bf16.msra.mxu0 %v384
    %477 = vmatpush.bf16.msra.mxu0 %v380
    %478 = vmatpush.bf16.msra.mxu0 %v376
    %479 = vmatpush.bf16.msra.mxu0 %v372
    %480 = vmatpush.bf16.msra.mxu0 %v368
    %481 = vmatpush.bf16.msra.mxu0 %v364
    %482 = vmatmul.bf16.gmra.mxu0 %v137
    %v483 = vpop.f32.mrf.mxu0
    %v484 = vadd.f32 %v470, %v483
    %v485 = vpop.f32.mrf.mxu0
    %v486 = vadd.f32 %v472, %v485
    %487 = vdwg.mxu0
    %488 = vmatpush.bf16.msra.mxu0 %v361
    %489 = vmatpush.bf16.msra.mxu0 %v357
    %490 = vmatpush.bf16.msra.mxu0 %v353
    %491 = vmatpush.bf16.msra.mxu0 %v349
    %492 = vmatpush.bf16.msra.mxu0 %v345
    %493 = vmatpush.bf16.msra.mxu0 %v341
    %494 = vmatpush.bf16.msra.mxu0 %v337
    %495 = vmatpush.bf16.msra.mxu0 %v333
    %496 = vmatmul.bf16.gmra.mxu0 %v136
    %v497 = vpop.f32.mrf.mxu0
    %v498 = vadd.f32 0.0, %v497
    %v499 = vpop.f32.mrf.mxu0
    %v500 = vadd.f32 0.0, %v499
    %501 = vdwg.mxu0
    %502 = vmatpush.bf16.msra.mxu0 %v393
    %503 = vmatpush.bf16.msra.mxu0 %v389
    %504 = vmatpush.bf16.msra.mxu0 %v385
    %505 = vmatpush.bf16.msra.mxu0 %v381
    %506 = vmatpush.bf16.msra.mxu0 %v377
    %507 = vmatpush.bf16.msra.mxu0 %v373
    %508 = vmatpush.bf16.msra.mxu0 %v369
    %509 = vmatpush.bf16.msra.mxu0 %v365
    %510 = vmatmul.bf16.gmra.mxu0 %v137
    %v511 = vpop.f32.mrf.mxu0
    %v512 = vadd.f32 %v498, %v511
    %v513 = vpop.f32.mrf.mxu0
    %v514 = vadd.f32 %v500, %v513
    %515 = vdwg.mxu0
    %516 = vmatpush.bf16.msra.mxu0 %v362
    %517 = vmatpush.bf16.msra.mxu0 %v358
    %518 = vmatpush.bf16.msra.mxu0 %v354
    %519 = vmatpush.bf16.msra.mxu0 %v350
    %520 = vmatpush.bf16.msra.mxu0 %v346
    %521 = vmatpush.bf16.msra.mxu0 %v342
    %522 = vmatpush.bf16.msra.mxu0 %v338
    %523 = vmatpush.bf16.msra.mxu0 %v334
    %524 = vmatmul.bf16.gmra.mxu0 %v136
    %v525 = vpop.f32.mrf.mxu0
    %v526 = vadd.f32 0.0, %v525
    %v527 = vpop.f32.mrf.mxu0
    %v528 = vadd.f32 0.0, %v527
    %529 = vdwg.mxu0
    %530 = vmatpush.bf16.msra.mxu0 %v394
    %531 = vmatpush.bf16.msra.mxu0 %v390
    %532 = vmatpush.bf16.msra.mxu0 %v386
    %533 = vmatpush.bf16.msra.mxu0 %v382
    %534 = vmatpush.bf16.msra.mxu0 %v378
    %535 = vmatpush.bf16.msra.mxu0 %v374
    %536 = vmatpush.bf16.msra.mxu0 %v370
    %537 = vmatpush.bf16.msra.mxu0 %v366
    %538 = vmatmul.bf16.gmra.mxu0 %v137
    %v539 = vpop.f32.mrf.mxu0
    %v540 = vadd.f32 %v526, %v539
    %v541 = vpop.f32.mrf.mxu0
    %v542 = vadd.f32 %v528, %v541
    %543 = vdwg.mxu0
    %544 = vmatpush.bf16.msra.mxu0 %v363
    %545 = vmatpush.bf16.msra.mxu0 %v359
    %546 = vmatpush.bf16.msra.mxu0 %v355
    %547 = vmatpush.bf16.msra.mxu0 %v351
    %548 = vmatpush.bf16.msra.mxu0 %v347
    %549 = vmatpush.bf16.msra.mxu0 %v343
    %550 = vmatpush.bf16.msra.mxu0 %v339
    %551 = vmatpush.bf16.msra.mxu0 %v335
    %552 = vmatmul.bf16.gmra.mxu0 %v136
    %v553 = vpop.f32.mrf.mxu0
    %v554 = vadd.f32 0.0, %v553
    %v555 = vpop.f32.mrf.mxu0
    %v556 = vadd.f32 0.0, %v555
    %557 = vdwg.mxu0
    %558 = vmatpush.bf16.msra.mxu0 %v395
    %559 = vmatpush.bf16.msra.mxu0 %v391
    %560 = vmatpush.bf16.msra.mxu0 %v387
    %561 = vmatpush.bf16.msra.mxu0 %v383
    %562 = vmatpush.bf16.msra.mxu0 %v379
    %563 = vmatpush.bf16.msra.mxu0 %v375
    %564 = vmatpush.bf16.msra.mxu0 %v371
    %565 = vmatpush.bf16.msra.mxu0 %v367
    %566 = vmatmul.bf16.gmra.mxu0 %v137
    %v567 = vpop.f32.mrf.mxu0
    %v568 = vadd.f32 %v554, %v567
    %v569 = vpop.f32.mrf.mxu0
    %v570 = vadd.f32 %v556, %v569
    %571 = vdwg.mxu0
    %v572 = vmul.f32 %v484, %v484
    %v573 = vmul.f32 %v512, %v512
    %v574 = vmul.f32 %v486, %v486
    %v575 = vmul.f32 %v514, %v514
    %v576 = vmul.f32 %v540, %v540
    %v577 = vmul.f32 %v568, %v568
    %v578 = vmul.f32 %v542, %v542
    %v579 = vmul.f32 %v570, %v570
    %v580 = vadd.f32 %v572, %v576
    %v581 = vadd.f32 %v573, %v577
    %v582 = vadd.f32 %v574, %v578
    %v583 = vadd.f32 %v575, %v579
    %v584 = vrsqrt.pop %v580
    %v585 = vmul.f32 %v584, %v580
    %v586 = vmul.f32 %v585, %v584
    %v587 = vmul.f32 0.5, %v586
    %v588 = vsub.f32 1.5, %v587
    %v589 = vmul.f32 %v584, %v588
    %v590 = vmul.f32 %v580, %v589
    %vm591 = vcmp.eq.f32.partialorder %v580, inf
    %v592 = vsel %vm591, %v580, %v590
    %vm593 = vcmp.eq.f32.partialorder %v580, 0.0
    %v594 = vand.u32 %v580, 2147483648
    %v595 = vsel %vm593, %v594, %v592
    %v596 = vrsqrt.pop %v581
    %v597 = vmul.f32 %v596, %v581
    %v598 = vmul.f32 %v597, %v596
    %v599 = vmul.f32 0.5, %v598
    %v600 = vsub.f32 1.5, %v599
    %v601 = vmul.f32 %v596, %v600
    %v602 = vmul.f32 %v581, %v601
    %vm603 = vcmp.eq.f32.partialorder %v581, inf
    %v604 = vsel %vm603, %v581, %v602
    %vm605 = vcmp.eq.f32.partialorder %v581, 0.0
    %v606 = vand.u32 %v581, 2147483648
    %v607 = vsel %vm605, %v606, %v604
    %v608 = vrsqrt.pop %v582
    %v609 = vmul.f32 %v608, %v582
    %v610 = vmul.f32 %v609, %v608
    %v611 = vmul.f32 0.5, %v610
    %v612 = vsub.f32 1.5, %v611
    %v613 = vmul.f32 %v608, %v612
    %v614 = vmul.f32 %v582, %v613
    %vm615 = vcmp.eq.f32.partialorder %v582, inf
    %v616 = vsel %vm615, %v582, %v614
    %vm617 = vcmp.eq.f32.partialorder %v582, 0.0
    %v618 = vand.u32 %v582, 2147483648
    %v619 = vsel %vm617, %v618, %v616
    %v620 = vrsqrt.pop %v583
    %v621 = vmul.f32 %v620, %v583
    %v622 = vmul.f32 %v621, %v620
    %v623 = vmul.f32 0.5, %v622
    %v624 = vsub.f32 1.5, %v623
    %v625 = vmul.f32 %v620, %v624
    %v626 = vmul.f32 %v583, %v625
    %vm627 = vcmp.eq.f32.partialorder %v583, inf
    %v628 = vsel %vm627, %v583, %v626
    %vm629 = vcmp.eq.f32.partialorder %v583, 0.0
    %v630 = vand.u32 %v583, 2147483648
    %v631 = vsel %vm629, %v630, %v628
    %v632 = vand.u32 2147483647, %v484
    %v633 = vand.u32 2147483647, %v540
    %v634 = vmin.f32 %v632, %v633
    %v635 = vmax.f32 %v632, %v633
    %v636 = vrcp.pop %v635
    %v637 = vmul.f32 %v635, %v636
    %v638 = vsub.f32 1.0, %v637
    %v639 = vmul.f32 %v636, %v638
    %v640 = vadd.f32 %v636, %v639
    %vm641 = vweird.f32 %v635
    %vm642 = vweird.f32 %v636
    %vm643 = vmor %vm641, %vm642
    %v644 = vsel %vm643, %v636, %v640
    %v645 = vand.u32 2147483647, %v635
    %vm646 = vcmp.eq.f32.partialorder %v645, 8.507059e+37
    %v647 = vand.u32 %v635, 2147483648
    %v648 = vor.u32 1.1754944e-38, %v647
    %v649 = vsel %vm646, %v648, %v644
    %v650 = vmul.f32 %v634, %v649
    %v651 = vmul.f32 %v650, %v650
    %v652 = vmul.f32 0.002785687, %v651
    %v653 = vadd.f32 %v652, -0.015866
    %v654 = vmul.f32 %v653, %v651
    %v655 = vadd.f32 %v654, 0.04247222
    %v656 = vmul.f32 %v655, %v651
    %v657 = vadd.f32 %v656, -0.074975304
    %v658 = vmul.f32 %v657, %v651
    %v659 = vadd.f32 %v658, 0.1064488
    %v660 = vmul.f32 %v659, %v651
    %v661 = vadd.f32 %v660, -0.14207031
    %v662 = vmul.f32 %v661, %v651
    %v663 = vadd.f32 %v662, 0.19993454
    %v664 = vmul.f32 %v663, %v651
    %v665 = vadd.f32 %v664, -0.33333147
    %v666 = vmul.f32 %v665, %v651
    %v667 = vmul.f32 %v666, %v650
    %v668 = vadd.f32 %v667, %v650
    %vm669 = vcmp.gt.f32.partialorder %v633, %v632
    %v670 = vsub.f32 1.5707964, %v668
    %v671 = vsel %vm669, %v670, %v668
    %vm672 = vcmp.lt.f32.partialorder %v484, 0.0
    %v673 = vsub.f32 3.1415927, %v671
    %v674 = vsel %vm672, %v673, %v671
    %vm675 = vcmp.lt.s32.totalorder %v484, 0
    %v676 = vsel %vm675, 3.1415927, 0.0
    %vm677 = vcmp.eq.f32.partialorder %v540, 0.0
    %v678 = vsel %vm677, %v676, %v674
    %vm679 = vcmp.ne.f32.partialorder %v484, %v484
    %vm680 = vcmp.ne.f32.partialorder %v540, %v540
    %vm681 = vmor %vm679, %vm680
    %v682 = vsel %vm681, nan, %v678
    %vm683 = vcmp.lt.f32.partialorder %v484, 0.0
    %v684 = vsel %vm683, 2.3561945, 0.7853982
    %vm685 = vcmp.eq.s32.totalorder %v632, inf
    %vm686 = vcmp.eq.s32.totalorder %v633, inf
    %vm687 = vmand %vm685, %vm686
    %v688 = vsel %vm687, %v684, %v682
    %v689 = vand.u32 2147483647, %v688
    %v690 = vand.u32 %v540, 2147483648
    %v691 = vor.u32 %v689, %v690
    %v692 = vand.u32 2147483647, %v512
    %v693 = vand.u32 2147483647, %v568
    %v694 = vmin.f32 %v692, %v693
    %v695 = vmax.f32 %v692, %v693
    %v696 = vrcp.pop %v695
    %v697 = vmul.f32 %v695, %v696
    %v698 = vsub.f32 1.0, %v697
    %v699 = vmul.f32 %v696, %v698
    %v700 = vadd.f32 %v696, %v699
    %vm701 = vweird.f32 %v695
    %vm702 = vweird.f32 %v696
    %vm703 = vmor %vm701, %vm702
    %v704 = vsel %vm703, %v696, %v700
    %v705 = vand.u32 2147483647, %v695
    %vm706 = vcmp.eq.f32.partialorder %v705, 8.507059e+37
    %v707 = vand.u32 %v695, 2147483648
    %v708 = vor.u32 1.1754944e-38, %v707
    %v709 = vsel %vm706, %v708, %v704
    %v710 = vmul.f32 %v694, %v709
    %v711 = vmul.f32 %v710, %v710
    %v712 = vmul.f32 0.002785687, %v711
    %v713 = vadd.f32 %v712, -0.015866
    %v714 = vmul.f32 %v713, %v711
    %v715 = vadd.f32 %v714, 0.04247222
    %v716 = vmul.f32 %v715, %v711
    %v717 = vadd.f32 %v716, -0.074975304
    %v718 = vmul.f32 %v717, %v711
    %v719 = vadd.f32 %v718, 0.1064488
    %v720 = vmul.f32 %v719, %v711
    %v721 = vadd.f32 %v720, -0.14207031
    %v722 = vmul.f32 %v721, %v711
    %v723 = vadd.f32 %v722, 0.19993454
    %v724 = vmul.f32 %v723, %v711
    %v725 = vadd.f32 %v724, -0.33333147
    %v726 = vmul.f32 %v725, %v711
    %v727 = vmul.f32 %v726, %v710
    %v728 = vadd.f32 %v727, %v710
    %vm729 = vcmp.gt.f32.partialorder %v693, %v692
    %v730 = vsub.f32 1.5707964, %v728
    %v731 = vsel %vm729, %v730, %v728
    %vm732 = vcmp.lt.f32.partialorder %v512, 0.0
    %v733 = vsub.f32 3.1415927, %v731
    %v734 = vsel %vm732, %v733, %v731
    %vm735 = vcmp.lt.s32.totalorder %v512, 0
    %v736 = vsel %vm735, 3.1415927, 0.0
    %vm737 = vcmp.eq.f32.partialorder %v568, 0.0
    %v738 = vsel %vm737, %v736, %v734
    %vm739 = vcmp.ne.f32.partialorder %v512, %v512
    %vm740 = vcmp.ne.f32.partialorder %v568, %v568
    %vm741 = vmor %vm739, %vm740
    %v742 = vsel %vm741, nan, %v738
    %vm743 = vcmp.lt.f32.partialorder %v512, 0.0
    %v744 = vsel %vm743, 2.3561945, 0.7853982
    %vm745 = vcmp.eq.s32.totalorder %v692, inf
    %vm746 = vcmp.eq.s32.totalorder %v693, inf
    %vm747 = vmand %vm745, %vm746
    %v748 = vsel %vm747, %v744, %v742
    %v749 = vand.u32 2147483647, %v748
    %v750 = vand.u32 %v568, 2147483648
    %v751 = vor.u32 %v749, %v750
    %v752 = vand.u32 2147483647, %v486
    %v753 = vand.u32 2147483647, %v542
    %v754 = vmin.f32 %v752, %v753
    %v755 = vmax.f32 %v752, %v753
    %v756 = vrcp.pop %v755
    %v757 = vmul.f32 %v755, %v756
    %v758 = vsub.f32 1.0, %v757
    %v759 = vmul.f32 %v756, %v758
    %v760 = vadd.f32 %v756, %v759
    %vm761 = vweird.f32 %v755
    %vm762 = vweird.f32 %v756
    %vm763 = vmor %vm761, %vm762
    %v764 = vsel %vm763, %v756, %v760
    %v765 = vand.u32 2147483647, %v755
    %vm766 = vcmp.eq.f32.partialorder %v765, 8.507059e+37
    %v767 = vand.u32 %v755, 2147483648
    %v768 = vor.u32 1.1754944e-38, %v767
    %v769 = vsel %vm766, %v768, %v764
    %v770 = vmul.f32 %v754, %v769
    %v771 = vmul.f32 %v770, %v770
    %v772 = vmul.f32 0.002785687, %v771
    %v773 = vadd.f32 %v772, -0.015866
    %v774 = vmul.f32 %v773, %v771
    %v775 = vadd.f32 %v774, 0.04247222
    %v776 = vmul.f32 %v775, %v771
    %v777 = vadd.f32 %v776, -0.074975304
    %v778 = vmul.f32 %v777, %v771
    %v779 = vadd.f32 %v778, 0.1064488
    %v780 = vmul.f32 %v779, %v771
    %v781 = vadd.f32 %v780, -0.14207031
    %v782 = vmul.f32 %v781, %v771
    %v783 = vadd.f32 %v782, 0.19993454
    %v784 = vmul.f32 %v783, %v771
    %v785 = vadd.f32 %v784, -0.33333147
    %v786 = vmul.f32 %v785, %v771
    %v787 = vmul.f32 %v786, %v770
    %v788 = vadd.f32 %v787, %v770
    %vm789 = vcmp.gt.f32.partialorder %v753, %v752
    %v790 = vsub.f32 1.5707964, %v788
    %v791 = vsel %vm789, %v790, %v788
    %vm792 = vcmp.lt.f32.partialorder %v486, 0.0
    %v793 = vsub.f32 3.1415927, %v791
    %v794 = vsel %vm792, %v793, %v791
    %vm795 = vcmp.lt.s32.totalorder %v486, 0
    %v796 = vsel %vm795, 3.1415927, 0.0
    %vm797 = vcmp.eq.f32.partialorder %v542, 0.0
    %v798 = vsel %vm797, %v796, %v794
    %vm799 = vcmp.ne.f32.partialorder %v486, %v486
    %vm800 = vcmp.ne.f32.partialorder %v542, %v542
    %vm801 = vmor %vm799, %vm800
    %v802 = vsel %vm801, nan, %v798
    %vm803 = vcmp.lt.f32.partialorder %v486, 0.0
    %v804 = vsel %vm803, 2.3561945, 0.7853982
    %vm805 = vcmp.eq.s32.totalorder %v752, inf
    %vm806 = vcmp.eq.s32.totalorder %v753, inf
    %vm807 = vmand %vm805, %vm806
    %v808 = vsel %vm807, %v804, %v802
    %v809 = vand.u32 2147483647, %v808
    %v810 = vand.u32 %v542, 2147483648
    %v811 = vor.u32 %v809, %v810
    %v812 = vand.u32 2147483647, %v514
    %v813 = vand.u32 2147483647, %v570
    %v814 = vmin.f32 %v812, %v813
    %v815 = vmax.f32 %v812, %v813
    %v816 = vrcp.pop %v815
    %v817 = vmul.f32 %v815, %v816
    %v818 = vsub.f32 1.0, %v817
    %v819 = vmul.f32 %v816, %v818
    %v820 = vadd.f32 %v816, %v819
    %vm821 = vweird.f32 %v815
    %vm822 = vweird.f32 %v816
    %vm823 = vmor %vm821, %vm822
    %v824 = vsel %vm823, %v816, %v820
    %v825 = vand.u32 2147483647, %v815
    %vm826 = vcmp.eq.f32.partialorder %v825, 8.507059e+37
    %v827 = vand.u32 %v815, 2147483648
    %v828 = vor.u32 1.1754944e-38, %v827
    %v829 = vsel %vm826, %v828, %v824
    %v830 = vmul.f32 %v814, %v829
    %v831 = vmul.f32 %v830, %v830
    %v832 = vmul.f32 0.002785687, %v831
    %v833 = vadd.f32 %v832, -0.015866
    %v834 = vmul.f32 %v833, %v831
    %v835 = vadd.f32 %v834, 0.04247222
    %v836 = vmul.f32 %v835, %v831
    %v837 = vadd.f32 %v836, -0.074975304
    %v838 = vmul.f32 %v837, %v831
    %v839 = vadd.f32 %v838, 0.1064488
    %v840 = vmul.f32 %v839, %v831
    %v841 = vadd.f32 %v840, -0.14207031
    %v842 = vmul.f32 %v841, %v831
    %v843 = vadd.f32 %v842, 0.19993454
    %v844 = vmul.f32 %v843, %v831
    %v845 = vadd.f32 %v844, -0.33333147
    %v846 = vmul.f32 %v845, %v831
    %v847 = vmul.f32 %v846, %v830
    %v848 = vadd.f32 %v847, %v830
    %vm849 = vcmp.gt.f32.partialorder %v813, %v812
    %v850 = vsub.f32 1.5707964, %v848
    %v851 = vsel %vm849, %v850, %v848
    %vm852 = vcmp.lt.f32.partialorder %v514, 0.0
    %v853 = vsub.f32 3.1415927, %v851
    %v854 = vsel %vm852, %v853, %v851
    %vm855 = vcmp.lt.s32.totalorder %v514, 0
    %v856 = vsel %vm855, 3.1415927, 0.0
    %vm857 = vcmp.eq.f32.partialorder %v570, 0.0
    %v858 = vsel %vm857, %v856, %v854
    %vm859 = vcmp.ne.f32.partialorder %v514, %v514
    %vm860 = vcmp.ne.f32.partialorder %v570, %v570
    %vm861 = vmor %vm859, %vm860
    %v862 = vsel %vm861, nan, %v858
    %vm863 = vcmp.lt.f32.partialorder %v514, 0.0
    %v864 = vsel %vm863, 2.3561945, 0.7853982
    %vm865 = vcmp.eq.s32.totalorder %v812, inf
    %vm866 = vcmp.eq.s32.totalorder %v813, inf
    %vm867 = vmand %vm865, %vm866
    %v868 = vsel %vm867, %v864, %v862
    %v869 = vand.u32 2147483647, %v868
    %v870 = vand.u32 %v570, 2147483648
    %v871 = vor.u32 %v869, %v870
    %v872 = vsub.f32 %v595, %v619
    %v873 = vsub.f32 %v607, %v631
    %v874 = vand.u32 2147483647, %v872
    %v875 = vand.u32 2147483647, %v873
    %v876 = vsub.f32 %v691, %v811
    %v877 = vsub.f32 %v751, %v871
    %v878 = vand.u32 2147483647, %v876
    %v879 = vand.u32 2147483647, %v877
    %v880 = vld [vmem:[%s2] sm:$0x3]
    %v881 = vrot.slane %v874, 4
    %v882 = vadd.f32 %v874, %v881
    %v883 = vrot.slane %v882, 2
    %v884 = vadd.f32 %v882, %v883
    %v885 = vrot.slane %v884, 1
    %v886 = vadd.f32 %v884, %v885
    %v887 = vrot.slane %v875, 4
    %v888 = vadd.f32 %v875, %v887
    %v889 = vrot.slane %v888, 2
    %v890 = vadd.f32 %v888, %v889
    %v891 = vrot.slane %v890, 1
    %v892 = vadd.f32 %v890, %v891
    %v895 = vrot.slane %v892, 7
    %vm896 = vcmask 1040384
    %v897 = vsel %vm896, %v886, %v895
    %v899 = vadd.f32 %v880, %v897
    %v900 = vlaneseq
    %vm901 = vcmp.ge.s32.totalorder %v900, 0
    %vm902 = vcmp.lt.s32.totalorder %v900, 256
    %vm903 = vmand %vm901, %vm902
    %904 = vst.msk [vmem:[%s2] sm:$0x3] %vm903, %v899
    %v905 = vld [vmem:[%s3] sm:$0x3]
    %v906 = vrot.slane %v878, 4
    %v907 = vadd.f32 %v878, %v906
    %v908 = vrot.slane %v907, 2
    %v909 = vadd.f32 %v907, %v908
    %v910 = vrot.slane %v909, 1
    %v911 = vadd.f32 %v909, %v910
    %v912 = vrot.slane %v879, 4
    %v913 = vadd.f32 %v879, %v912
    %v914 = vrot.slane %v913, 2
    %v915 = vadd.f32 %v913, %v914
    %v916 = vrot.slane %v915, 1
    %v917 = vadd.f32 %v915, %v916
    %v920 = vrot.slane %v917, 7
    %v921 = vsel %vm896, %v911, %v920
    %v923 = vadd.f32 %v905, %v921
    %924 = vst.msk [vmem:[%s3] sm:$0x3] %vm903, %v923
    // Predicated region
    $region18: #{four_domain_loss.1} parent=1 // pred_check
      _
    $region19: #{four_domain_loss.1} parent=1 // pred_check_branch
      %926 = sbr.rel (0) target = $region21
    $region20: #{four_domain_loss.1} parent=1 // pred_region
      _
    $region21: #{four_domain_loss.1} parent=1 // pred_fallthru
      _
    // Predicated region
    $region22: #{four_domain_loss.1} parent=1 // pred_check
      _
    $region23: #{four_domain_loss.1} parent=1 // pred_check_branch
      %928 = sbr.rel (0) target = $region25
    $region24: #{four_domain_loss.1} parent=1 // pred_region
      _
    $region25: #{four_domain_loss.1} parent=1 // pred_fallthru
      _
    // Predicated region
    $region26: #{four_domain_loss.1} parent=1 // pred_check
      _
    $region27: #{four_domain_loss.1} parent=1 // pred_check_branch
      %930 = sbr.rel (0) target = $region29
    $region28: #{four_domain_loss.1} parent=1 // pred_region
      _
    $region29: #{four_domain_loss.1} parent=1 // pred_fallthru
      _
    // Predicated region
    $region30: #{four_domain_loss.1} parent=1 // pred_check
      _
    $region31: #{four_domain_loss.1} parent=1 // pred_check_branch
      %932 = sbr.rel (0) target = $region33
    $region32: #{four_domain_loss.1} parent=1 // pred_region
      _
    $region33: #{four_domain_loss.1} parent=1 // pred_fallthru
      _
    %933 = vsyncpa [#allocation3], 1

</llo_original>
